<compile_context>
chip_gen: v7x
topology: tpu7x:2x2x1
jax: 0.10.0
libtpu: 0.0.40
codegen_flags: <defaults>
</compile_context>

<pallas_src>
import functools
import math

import jax
import jax.numpy as jnp
from jax.experimental import pallas as pl
from jax.experimental.pallas import tpu as pltpu

LANE = 128
SUBLANE = 8
MAX_BLK_ROWS = 1024          # (1024,128) f32 block = 512 KiB / input / pipeline buffer
LOGVAR_MIN = -30.0
LOGVAR_MAX = 20.0


def _kl_sum_kernel(mu_ref, lv_ref, o_ref, acc_ref, *,
                   blk_rows, rows_valid, spp, full_blocks, needs_mask):
    """Accumulate sum(mu^2 + exp(clip(lv)) - 1 - clip(lv)) over the streamed blocks.

    grid = (parts, N, steps_per_part); the (8,128) accumulator is resident across
    the (N, steps) axes and reduced+stored once per part.
    """
    c = pl.program_id(0)           # part (TensorCore shard on v7x)
    n = pl.program_id(1)           # sample index
    i = pl.program_id(2)           # step within this part

    @pl.when((n == 0) & (i == 0))
    def _():
        acc_ref[...] = jnp.zeros_like(acc_ref)

    mu = mu_ref[...].astype(jnp.float32)
    lv = jnp.clip(lv_ref[...].astype(jnp.float32), LOGVAR_MIN, LOGVAR_MAX)  # fused clamp
    e = mu * mu + jnp.exp(lv) - 1.0 - lv          # (blk_rows, LANE) f32, VPU + EUP only

    def fold(v):
        # Pure VPU adds into the resident (8,128) accumulator; the expensive
        # cross-lane reduction is deferred to the very last step of this part.
        acc_ref[...] += v.reshape(blk_rows // SUBLANE, SUBLANE, LANE).sum(axis=0)

    if not needs_mask:
        fold(e)
    else:
        j = c * spp + i            # logical row-block index inside a sample's range

        @pl.when(j < full_blocks)  # steady state: fully-valid block, no mask
        def _():
            fold(e)

        @pl.when(j >= full_blocks)  # ragged last block or clamped duplicate block
        def _():
            row = jax.lax.broadcasted_iota(jnp.int32, e.shape, 0) + j * blk_rows
            # NOTE: must stay a true select (not multiply-by-mask): out-of-range
            # rows hold garbage that may be Inf/NaN after exp().
            fold(jnp.where(row < rows_valid, e, 0.0))

    @pl.when((n == pl.num_programs(1) - 1) & (i == pl.num_programs(2) - 1))
    def _():
        o_ref[...] = jnp.sum(acc_ref[...], keepdims=True)


def _kl_pallas_sum(mu4, lv4, mu_half, lv_half):
    """Sum of the KL integrand over mu4[:, mu_half] / lv4[:, lv_half].

    mu4 / lv4 are 4-D (N, H, R, 128) arrays; on the fused path they are the SAME
    array (the reshaped raw `parameters`), so each half is DMAed from HBM once.
    """
    N, _, R, lane = mu4.shape
    assert lane == LANE and R % SUBLANE == 0 and R > 0

    blk_rows = min(MAX_BLK_ROWS, R)            # adaptive; always a multiple of 8
    nblk = pl.cdiv(R, blk_rows)
    # Split the row-block range across 2 parts so v7x uses both TensorCores.
    # TODO(synk): gate num_parts on the detected core count instead of always 2.
    num_parts = 2 if nblk >= 2 else 1
    spp = pl.cdiv(nblk, num_parts)
    full_blocks = R // blk_rows                # blocks entirely inside [0, R)
    needs_mask = (full_blocks * blk_rows != R) or (num_parts * spp != nblk)

    def make_index_map(half):
        def index_map(c, n, i):
            j = c * spp + i
            if num_parts * spp != nblk:
                j = jnp.minimum(j, nblk - 1)   # keep DMA in bounds; masked in-kernel
            return (n, half, j, 0)
        return index_map

    kernel = functools.partial(
        _kl_sum_kernel, blk_rows=blk_rows, rows_valid=R, spp=spp,
        full_blocks=full_blocks, needs_mask=needs_mask)

    out = pl.pallas_call(
        kernel,
        out_shape=jax.ShapeDtypeStruct((num_parts, 1), jnp.float32),
        grid_spec=pltpu.PrefetchScalarGridSpec(
            num_scalar_prefetch=0,
            grid=(num_parts, N, spp),
            in_specs=[
                pl.BlockSpec((None, None, blk_rows, LANE), make_index_map(mu_half)),
                pl.BlockSpec((None, None, blk_rows, LANE), make_index_map(lv_half)),
            ],
            out_specs=pl.BlockSpec((1, 1), lambda c, n, i: (c, 0)),
            scratch_shapes=[pltpu.VMEM((SUBLANE, LANE), jnp.float32)],
        ),
        compiler_params=pltpu.CompilerParams(
            dimension_semantics=("parallel", "arbitrary", "arbitrary")),
    )(mu4, lv4)
    return jnp.sum(out)


def _kl_tail_sum(mu, lv):
    """Plain-JAX integrand sum for tiny ragged tails (< one vreg tile)."""
    mu = mu.astype(jnp.float32)
    lv = jnp.clip(lv.astype(jnp.float32), LOGVAR_MIN, LOGVAR_MAX)
    return jnp.sum(mu * mu + jnp.exp(lv) - 1.0 - lv)


def kl_sum_from_mean_logvar(mean, logvar):
    """Generic (two-array) path: sum of the integrand over mean/logvar."""
    assert mean.shape == logvar.shape
    m = mean.reshape(-1)
    lv = logvar.reshape(-1)
    n = m.size
    # Trim to whole vreg tiles (16 rows for packed dtypes, 8 for 32-bit); the tiny
    # remainder is summed in plain JAX instead of materializing a padded copy.
    row_align = SUBLANE if mean.dtype.itemsize >= 4 else 2 * SUBLANE
    tile = row_align * LANE
    n_main = (n // tile) * tile

    total = jnp.float32(0.0)
    if n_main < n:
        total = total + _kl_tail_sum(m[n_main:], lv[n_main:])
    if n_main > 0:
        rows = n_main // LANE
        mu4 = m[:n_main].reshape(1, 1, rows, LANE)
        lv4 = lv[:n_main].reshape(1, 1, rows, LANE)
        total = total + _kl_pallas_sum(mu4, lv4, 0, 0)
    return total


def kl_sum_from_parameters(params):
    """Fused single-pass path: channel split + clamp + reduction in one kernel.

    `params` has shape (N, 2C, ...); the first C channels are the mean, the last C
    are the (unclamped) logvar.  Both halves are read from HBM exactly once.
    """
    N = params.shape[0]
    half = (params.shape[1] // 2) * math.prod(params.shape[2:])
    p3 = params.reshape(N, 2, half)                       # contiguous reshape
    if half % (SUBLANE * LANE) == 0 and half > 0:
        p4 = p3.reshape(N, 2, half // LANE, LANE)
        return _kl_pallas_sum(p4, p4, 0, 1)
    # Per-sample half size not vreg-tile aligned: fall back to the two-array path
    # (XLA materializes the split; still correct, just extra HBM traffic).
    return kl_sum_from_mean_logvar(p3[:, 0], p3[:, 1])


class DiagonalGaussianDistribution:
    """Minimal JAX port of the LDM/basicsr posterior that KlLoss consumes."""

    def __init__(self, parameters, deterministic=False):
        self.parameters = parameters
        self.deterministic = deterministic
        mean, logvar = jnp.split(parameters, 2, axis=1)
        self.mean = mean
        self.logvar = jnp.clip(logvar, LOGVAR_MIN, LOGVAR_MAX)

    def kl(self):
        # Pure-JAX reference path (per-sample KL); used for verification only.
        if self.deterministic:
            return jnp.zeros((self.mean.shape[0],), jnp.float32)
        m = self.mean.astype(jnp.float32)
        lv = self.logvar.astype(jnp.float32)
        axes = tuple(range(1, m.ndim))
        return 0.5 * jnp.sum(m * m + jnp.exp(lv) - 1.0 - lv, axis=axes)


class KlLoss:
    """JAX/Pallas port of basicsr KlLoss (forward only)."""

    def __init__(self, loss_weight=1.0, reduction='mean'):
        # `reduction` accepted for API parity; the reference forward ignores it.
        self.loss_weight = loss_weight

    def __call__(self, posterior):
        if getattr(posterior, "deterministic", False):
            return jnp.float32(0.0)
        params = getattr(posterior, "parameters", None)
        if params is not None and params.ndim >= 2 and params.shape[1] % 2 == 0:
            batch = params.shape[0]
            total = kl_sum_from_parameters(params)     # single-pass fused kernel
        else:
            batch = posterior.mean.shape[0]
            total = kl_sum_from_mean_logvar(posterior.mean, posterior.logvar)
        # kl per sample = 0.5 * sum_{c,h,w}; forward = w * sum_n(kl_n) / N
        return (self.loss_weight * 0.5 / batch) * total


def _check(params_shape, key, loss_weight=1.0):
    key, k = jax.random.split(key)
    params = jax.random.normal(k, params_shape, dtype=jnp.float32)
    posterior = DiagonalGaussianDistribution(params)
    loss = jax.block_until_ready(KlLoss(loss_weight=loss_weight)(posterior))
    kl = posterior.kl()
    ref = jax.block_until_ready(loss_weight * (jnp.sum(kl) / kl.shape[0]))
    rel = abs(float(loss) - float(ref)) / max(1.0, abs(float(ref)))
    assert rel < 1e-4, (params_shape, float(loss), float(ref))
    return key


if __name__ == "__main__":
    key = jax.random.PRNGKey(0)
    # batch=2, latent C=4 (parameters carry 2*C channels), 16x16 spatial:
    # fused single-block path.
    key = _check((2, 8, 16, 16), key)
    # half = 4*192*192 = 147456 -> 1152 rows -> 2 blocks over 2 parts, ragged last
    # block (exercises the masked pl.when branch + per-part partial outputs).
    key = _check((2, 8, 192, 192), key)
    # half = 4*320*256 -> 2560 rows -> 3 blocks over 2 parts (exercises the
    # clamped-duplicate block masking).
    key = _check((1, 8, 320, 256), key)
    # per-sample half not a multiple of 1024 -> generic fallback (kernel + JAX tail).
    key = _check((2, 4, 33, 50), key)
    # tiny ragged case -> pure-JAX tail only.
    key = _check((1, 6, 5, 7), key)
    print("KERNEL_OK")
</pallas_src>

<mosaic_0001>
module attributes {stable_mosaic.version = 11 : i64} {
  func.func @_kl_sum_kernel(%arg0: i32, %arg1: i32, %arg2: i32, %arg3: memref<1x1x8x128xf32, #tpu.memory_space<vmem>>, %arg4: memref<1x1x8x128xf32, #tpu.memory_space<vmem>>, %arg5: memref<1x1xf32, #tpu.memory_space<vmem>>, %arg6: memref<8x128xf32, #tpu.memory_space<vmem>>) attributes {dimension_semantics = [#tpu.dimension_semantics<parallel>, #tpu.dimension_semantics<arbitrary>, #tpu.dimension_semantics<arbitrary>], iteration_bounds = array<i64: 1, 2, 1>, scalar_prefetch = 0 : i64, scratch_operands = 1 : i64, tpu.core_type = #tpu.core_type<tc>, window_params = [{transform_indices = @transform_0, window_bounds = array<i64: 1, 1, 8, 128>}, {transform_indices = @transform_1, window_bounds = array<i64: 1, 1, 8, 128>}, {transform_indices = @transform_2, window_bounds = array<i64: 1, 1>}]} {
    %c0_i32 = arith.constant 0 : i32
    %0 = arith.cmpi eq, %arg1, %c0_i32 : i32
    %c0_i32_0 = arith.constant 0 : i32
    %1 = arith.cmpi eq, %arg2, %c0_i32_0 : i32
    %2 = arith.andi %0, %1 : i1
    %3 = arith.extui %2 : i1 to i32
    %c0_i32_1 = arith.constant 0 : i32
    %4 = arith.cmpi ne, %3, %c0_i32_1 : i32
    scf.if %4 {
      %cst_18 = arith.constant 0.000000e+00 : f32
      %29 = vector.broadcast %cst_18 : f32 to vector<8x128xf32>
      %c0_19 = arith.constant 0 : index
      %c0_20 = arith.constant 0 : index
      %30 = vector.load %arg6[%c0_19, %c0_20] : memref<8x128xf32, #tpu.memory_space<vmem>>, vector<8x128xf32>
      tpu.vector_store %arg6[%c0_19, %c0_20], %29 {strides = array<i32>} : memref<8x128xf32, #tpu.memory_space<vmem>>, vector<8x128xf32>,
    } else {
    }
    %c0 = arith.constant 0 : index
    %c0_2 = arith.constant 0 : index
    %c0_3 = arith.constant 0 : index
    %c0_4 = arith.constant 0 : index
    %5 = vector.load %arg3[%c0, %c0_2, %c0_3, %c0_4] : memref<1x1x8x128xf32, #tpu.memory_space<vmem>>, vector<1x1x8x128xf32>
    %6 = vector.shape_cast %5 : vector<1x1x8x128xf32> to vector<8x128xf32>
    %c0_5 = arith.constant 0 : index
    %c0_6 = arith.constant 0 : index
    %c0_7 = arith.constant 0 : index
    %c0_8 = arith.constant 0 : index
    %7 = vector.load %arg4[%c0_5, %c0_6, %c0_7, %c0_8] : memref<1x1x8x128xf32, #tpu.memory_space<vmem>>, vector<1x1x8x128xf32>
    %8 = vector.shape_cast %7 : vector<1x1x8x128xf32> to vector<8x128xf32>
    %cst = arith.constant -3.000000e+01 : f32
    %cst_9 = arith.constant 2.000000e+01 : f32
    %9 = vector.broadcast %cst : f32 to vector<8x128xf32>
    %10 = arith.maximumf %9, %8 : vector<8x128xf32>
    %11 = vector.broadcast %cst_9 : f32 to vector<8x128xf32>
    %12 = arith.minimumf %11, %10 : vector<8x128xf32>
    %13 = arith.mulf %6, %6 : vector<8x128xf32>
    %14 = math.exp %12 : vector<8x128xf32>
    %15 = arith.addf %13, %14 : vector<8x128xf32>
    %cst_10 = arith.constant 1.000000e+00 : f32
    %16 = vector.broadcast %cst_10 : f32 to vector<8x128xf32>
    %17 = arith.subf %15, %16 : vector<8x128xf32>
    %18 = arith.subf %17, %12 : vector<8x128xf32>
    %c0_11 = arith.constant 0 : index
    %c0_12 = arith.constant 0 : index
    %19 = vector.load %arg6[%c0_11, %c0_12] : memref<8x128xf32, #tpu.memory_space<vmem>>, vector<8x128xf32>
    %20 = vector.shape_cast %18 : vector<8x128xf32> to vector<1x8x128xf32>
    %cst_13 = arith.constant dense<0.000000e+00> : vector<8x128xf32>
    %21 = vector.multi_reduction <add>, %20, %cst_13 [0] : vector<1x8x128xf32> to vector<8x128xf32>
    %22 = arith.addf %19, %21 : vector<8x128xf32>
    %c0_14 = arith.constant 0 : index
    %c0_15 = arith.constant 0 : index
    %23 = vector.load %arg6[%c0_14, %c0_15] : memref<8x128xf32, #tpu.memory_space<vmem>>, vector<8x128xf32>
    tpu.vector_store %arg6[%c0_14, %c0_15], %22 {strides = array<i32>} : memref<8x128xf32, #tpu.memory_space<vmem>>, vector<8x128xf32>,
    %c1_i32 = arith.constant 1 : i32
    %24 = arith.cmpi eq, %arg1, %c1_i32 : i32
    %c0_i32_16 = arith.constant 0 : i32
    %25 = arith.cmpi eq, %arg2, %c0_i32_16 : i32
    %26 = arith.andi %24, %25 : i1
    %27 = arith.extui %26 : i1 to i32
    %c0_i32_17 = arith.constant 0 : i32
    %28 = arith.cmpi ne, %27, %c0_i32_17 : i32
    scf.if %28 {
      %c0_18 = arith.constant 0 : index
      %c0_19 = arith.constant 0 : index
      %29 = vector.load %arg6[%c0_18, %c0_19] : memref<8x128xf32, #tpu.memory_space<vmem>>, vector<8x128xf32>
      %30 = vector.shape_cast %29 : vector<8x128xf32> to vector<1x8x128xf32>
      %cst_20 = arith.constant dense<0.000000e+00> : vector<1xf32>
      %31 = vector.multi_reduction <add>, %30, %cst_20 [1, 2] : vector<1x8x128xf32> to vector<1xf32>
      %32 = vector.shape_cast %31 : vector<1xf32> to vector<1x1x1xf32>
      %33 = vector.extract %32[0, 0, 0] : f32 from vector<1x1x1xf32>
      %34 = vector.broadcast %33 : f32 to vector<1x1xf32>
      %c0_21 = arith.constant 0 : index
      %c0_22 = arith.constant 0 : index
      %35 = vector.load %arg5[%c0_21, %c0_22] : memref<1x1xf32, #tpu.memory_space<vmem>>, vector<1x1xf32>
      tpu.vector_store %arg5[%c0_21, %c0_22], %34 {strides = array<i32>} : memref<1x1xf32, #tpu.memory_space<vmem>>, vector<1x1xf32>,
    } else {
    }
    return
  }
  func.func @transform_0(%arg0: i32, %arg1: i32, %arg2: i32) -> (i32, i32, i32, i32) {
    %c1_i32 = arith.constant 1 : i32
    %0 = arith.muli %arg0, %c1_i32 : i32
    %1 = arith.addi %0, %arg2 : i32
    %c0_i32 = arith.constant 0 : i32
    %c0_i32_0 = arith.constant 0 : i32
    %c0_i32_1 = arith.constant 0 : i32
    return %arg1, %c0_i32, %1, %c0_i32_0 : i32, i32, i32, i32
  }
  func.func @transform_1(%arg0: i32, %arg1: i32, %arg2: i32) -> (i32, i32, i32, i32) {
    %c1_i32 = arith.constant 1 : i32
    %0 = arith.muli %arg0, %c1_i32 : i32
    %1 = arith.addi %0, %arg2 : i32
    %c1_i32_0 = arith.constant 1 : i32
    %c0_i32 = arith.constant 0 : i32
    %c0_i32_1 = arith.constant 0 : i32
    return %arg1, %c1_i32_0, %1, %c0_i32 : i32, i32, i32, i32
  }
  func.func @transform_2(%arg0: i32, %arg1: i32, %arg2: i32) -> (i32, i32) {
    %c0_i32 = arith.constant 0 : i32
    %c0_i32_0 = arith.constant 0 : i32
    return %arg0, %c0_i32 : i32, i32
  }
}

</mosaic_0001>

<llo_original>
// kernel: tpu_custom_call.1
$region0: #{tpu_custom_call.1}
  #allocation0 [shape = 'u32[]', space=smem, size = 0x4, offset = 0x4, fixed_abs, tag = 'smem constant byte address 0x4 - core index']
  #allocation1 [shape = 'u32[144,128]{1,0:T(1,128)}', space=vmem, size = 0x12000, scoped, tag = 'internal scratch']
  #allocation2 [shape = 'f32[8,128]{1,0:T(8,128)}', space=vmem, size = 0x1000, scoped, tag = 'scratch operand']
  %s0 = inlined_call_operand.hbm [shape: f32[2,2,8,128], index: 0, kind: input, shape index: {}]
  %s1 = inlined_call_operand.hbm [shape: f32[2,2,8,128], index: 1, kind: input, shape index: {}]
  %s2 = inlined_call_operand.hbm [shape: f32[1,1], index: 2, kind: output, shape index: {}]
  %s3 = sld [smem:[#allocation0]]
  $region57: #{tpu_custom_call.1} parent=0
    _
  %s5 = ssub.s32 1, %s3
  %s6 = scalar_select 0, %s5, %s3
  $region1: #{tpu_custom_call.1} parent=0
    #allocation3 [shape = 'u8[8192]{0}', space=vmem, size = 0x2000, scoped, tag = 'input window, operand 0']
    #allocation4 [shape = 's32[2]{0}', space=sflag, size = 0x8, scoped, tag = 'scoped memory for tpu_custom_call.1']
    #allocation5 [shape = 's32[2]{0}', space=sflag, size = 0x8, scoped, tag = 'scoped memory for tpu_custom_call.1']
    #allocation6 [shape = 'u8[8192]{0}', space=vmem, size = 0x2000, scoped, tag = 'input window, operand 1']
    #allocation7 [shape = 's32[2]{0}', space=sflag, size = 0x8, scoped, tag = 'scoped memory for tpu_custom_call.1']
    #allocation8 [shape = 'u8[512]{0}', space=vmem, size = 0x400, scoped, tag = 'output window, operand 0, single buffered']
    %7 = vsyncpa [#allocation4], 0
    %s8 = scalar_lea.sflag [#allocation4], 1
    %9 = vsyncpa %s8, 0
    %10 = vsyncpa [#allocation7], 0
    %s11 = scalar_lea.sflag [#allocation7], 1
    %12 = vsyncpa %s11, 0
    %13 = vsyncpa [#allocation5], 0
    loop: start=0, step=1, limit=4
    $region2: #{tpu_custom_call.1} parent=1 // loop_pre_header
      _
    $region3: #{tpu_custom_call.1} parent=1 // loop_header
      %s15 = sphi 0, %s19
      %p16 = scmp.ge.s32.totalorder %s15, 4
      %s22 = sphi 0, %s41
      %s23 = sphi 0, %s37
      %s24 = sphi 0, %s33
      %s25 = sphi 0, %s22
      %s26 = sphi 0, %s23
      %s27 = sphi 0, %s24
      %s28 = sphi 0, %s25
      %s29 = sphi 0, %s26
      %s30 = sphi 0, %s27
      %s48 = sphi 0, %s50
      %s51 = sphi 0, %s48
      %s52 = sphi 0, %s51
      %s68 = sphi 0, %s52
      %s78 = sphi 0, %s80
      %s81 = sphi 0, %s78
      %s82 = sphi 0, %s81
      %s98 = sphi 0, %s82
      %s104 = sphi 0, %s106
      %s107 = sphi 0, %s104
      %s108 = sphi 0, %s107
      %s124 = sphi 0, %s108
    $region4: #{tpu_custom_call.1} parent=1 // loop_header_branch
      %18 = sbr.rel (%p16) target = $region8
    $region5: #{tpu_custom_call.1} parent=1 // loop_body
      %s20 = ssub.s32 %s15, 1
      %s21 = ssub.s32 %s15, 2
      %s31 = sadd.s32 1, %s24
      %p32 = scmp.ge.s32.totalorder %s31, 1
      %s33 = scalar_select %p32, 0, %s31
      %s34 = sadd.s32 1, %s23
      %s35 = scalar_select %p32, %s34, %s23
      %p36 = scmp.ge.s32.totalorder %s35, 2
      %s37 = scalar_select %p36, 0, %s35
      %s38 = sadd.s32 1, %s22
      %s39 = scalar_select %p36, %s38, %s22
      %p40 = scmp.ge.s32.totalorder %s39, 1
      %s41 = scalar_select %p40, 0, %s39
      %s42 = sadd.s32 %s22, %s24
      %s43 = sadd.s32 %s41, %s33
      %s44 = ssub.s32 %s23, %s37
      %s45 = ssub.s32 %s42, %s43
      %s46 = sor.u32 %s44, %s45
      %p47 = scmp.eq.s32.totalorder %s46, 0
      %s49 = sadd.s32 %s48, 1
      %s50 = scalar_select %p47, %s48, %s49
      %p53 = pneg %p47
      %p54 = scmp.eq.s32.totalorder %s15, 1
      %p55 = por %p53, %p54
      %p56 = scmp.ne.s32.totalorder %s48, %s51
      %p57 = scmp.eq.s32.totalorder %s15, 0
      %p58 = por %p56, %p57
      %p59 = scmp.ne.s32.totalorder %s48, %s51
      %p60 = scmp.eq.s32.totalorder %s20, 1
      %p61 = por %p59, %p60
      %p62 = scmp.ne.s32.totalorder %s51, %s52
      %p63 = scmp.eq.s32.totalorder %s20, 0
      %p64 = por %p62, %p63
      %p65 = scmp.ne.s32.totalorder %s51, %s52
      %p66 = scmp.eq.s32.totalorder %s21, 1
      %p67 = por %p65, %p66
      %p69 = scmp.ne.s32.totalorder %s52, %s68
      %p70 = scmp.eq.s32.totalorder %s21, 0
      %p71 = por %p69, %p70
      %s72 = sadd.s32 %s22, %s24
      %s73 = sadd.s32 %s41, %s33
      %s74 = ssub.s32 %s23, %s37
      %s75 = ssub.s32 %s72, %s73
      %s76 = sor.u32 %s74, %s75
      %p77 = scmp.eq.s32.totalorder %s76, 0
      %s79 = sadd.s32 %s78, 1
      %s80 = scalar_select %p77, %s78, %s79
      %p83 = pneg %p77
      %p84 = scmp.eq.s32.totalorder %s15, 1
      %p85 = por %p83, %p84
      %p86 = scmp.ne.s32.totalorder %s78, %s81
      %p87 = scmp.eq.s32.totalorder %s15, 0
      %p88 = por %p86, %p87
      %p89 = scmp.ne.s32.totalorder %s78, %s81
      %p90 = scmp.eq.s32.totalorder %s20, 1
      %p91 = por %p89, %p90
      %p92 = scmp.ne.s32.totalorder %s81, %s82
      %p93 = scmp.eq.s32.totalorder %s20, 0
      %p94 = por %p92, %p93
      %p95 = scmp.ne.s32.totalorder %s81, %s82
      %p96 = scmp.eq.s32.totalorder %s21, 1
      %p97 = por %p95, %p96
      %p99 = scmp.ne.s32.totalorder %s82, %s98
      %p100 = scmp.eq.s32.totalorder %s21, 0
      %p101 = por %p99, %p100
      %s102 = ssub.s32 %s22, %s41
      %p103 = scmp.eq.s32.totalorder %s102, 0
      %s105 = sadd.s32 %s104, 1
      %s106 = scalar_select %p103, %s104, %s105
      %p109 = pneg %p103
      %p110 = scmp.eq.s32.totalorder %s15, 1
      %p111 = por %p109, %p110
      %p112 = scmp.ne.s32.totalorder %s104, %s107
      %p113 = scmp.eq.s32.totalorder %s15, 0
      %p114 = por %p112, %p113
      %p115 = scmp.ne.s32.totalorder %s104, %s107
      %p116 = scmp.eq.s32.totalorder %s20, 1
      %p117 = por %p115, %p116
      %p118 = scmp.ne.s32.totalorder %s107, %s108
      %p119 = scmp.eq.s32.totalorder %s20, 0
      %p120 = por %p118, %p119
      %p121 = scmp.ne.s32.totalorder %s107, %s108
      %p122 = scmp.eq.s32.totalorder %s21, 1
      %p123 = por %p121, %p122
      %p125 = scmp.ne.s32.totalorder %s108, %s124
      %p126 = scmp.eq.s32.totalorder %s21, 0
      %p127 = por %p125, %p126
      %p128 = scmp.le.s32.totalorder 1, %s15
      %p129 = scmp.lt.s32.totalorder %s15, 3
      %p130 = pnand %p128, %p129
      %p131 = pneg %p130
      // Predicated region
      $region9: #{tpu_custom_call.1} parent=5 // pred_check
        _
      $region10: #{tpu_custom_call.1} parent=5 // pred_check_branch
        %133 = sbr.rel (%p130) target = $region12
      $region11: #{tpu_custom_call.1} parent=5 // pred_region
        %s134 = ssub.s32 %s15, 1
      $region12: #{tpu_custom_call.1} parent=5 // pred_fallthru
        _
      %p135 = scmp.lt.s32.totalorder %s15, 2
      // Predicated region
      $region13: #{tpu_custom_call.1} parent=5 // pred_check
        %p136 = pneg %p135
      $region14: #{tpu_custom_call.1} parent=5 // pred_check_branch
        %138 = sbr.rel (%p136) target = $region16
      $region15: #{tpu_custom_call.1} parent=5 // pred_region
        // Predicated region
        $region17: #{tpu_custom_call.1} parent=15 // pred_check
          %p139 = pneg %p58
        $region18: #{tpu_custom_call.1} parent=15 // pred_check_branch
          %141 = sbr.rel (%p139) target = $region20
        $region19: #{tpu_custom_call.1} parent=15 // pred_region
          %s142 = sand.u32 %s48, 1
          %s143 = scalar_lea.sflag [#allocation4], %s142
          %s144 = sand.u32 %s48, 1
          %s145 = smul.addr %s144, 8
          %s146 = scalar_lea.vmem [#allocation3], %s145
          %s147 = sadd.s32 %s22, %s24
          %s149 = ssub.s32 128, 128
          %150 = vsyncadd %s143, %s149
          %s151 = smul.addr %s23, 2
          %s152 = sadd.s32 %s147, %s151
          %s153 = smul.addr %s152, 128
          %s154 = scalar_lea.hbm %s0, %s153
          %s156 = sshll.u32 %s146, 4
          %s157 = int_to_ptr.vmem [resolvable:$true] %s156
          %159 = dma.hbm_to_vmem [thread:$0]  %s154, 128, %s157, %s143
        $region20: #{tpu_custom_call.1} parent=15 // pred_fallthru
          _
        // Predicated region
        $region21: #{tpu_custom_call.1} parent=15 // pred_check
          %p160 = pneg %p88
        $region22: #{tpu_custom_call.1} parent=15 // pred_check_branch
          %162 = sbr.rel (%p160) target = $region24
        $region23: #{tpu_custom_call.1} parent=15 // pred_region
          %s163 = sand.u32 %s78, 1
          %s164 = scalar_lea.sflag [#allocation7], %s163
          %s165 = sand.u32 %s78, 1
          %s166 = smul.addr %s165, 8
          %s167 = scalar_lea.vmem [#allocation6], %s166
          %s168 = sadd.s32 %s22, %s24
          %s170 = ssub.s32 128, 128
          %171 = vsyncadd %s164, %s170
          %s172 = sadd.s32 %s168, 1
          %s173 = smul.addr %s23, 2
          %s174 = sadd.s32 %s172, %s173
          %s175 = smul.addr %s174, 128
          %s176 = scalar_lea.hbm %s1, %s175
          %s178 = sshll.u32 %s167, 4
          %s179 = int_to_ptr.vmem [resolvable:$true] %s178
          %181 = dma.hbm_to_vmem [thread:$0]  %s176, 128, %s179, %s164
        $region24: #{tpu_custom_call.1} parent=15 // pred_fallthru
          _
      $region16: #{tpu_custom_call.1} parent=5 // pred_fallthru
        _
      %p182 = scmp.le.s32.totalorder 1, %s15
      %p183 = scmp.lt.s32.totalorder %s15, 3
      %p184 = pnand %p182, %p183
      %p185 = pneg %p184
      // Predicated region
      $region25: #{tpu_custom_call.1} parent=5 // pred_check
        _
      $region26: #{tpu_custom_call.1} parent=5 // pred_check_branch
        %187 = sbr.rel (%p184) target = $region28
      $region27: #{tpu_custom_call.1} parent=5 // pred_region
        %s188 = ssub.s32 %s15, 1
        %s189 = sand.u32 %s51, 1
        %s190 = scalar_lea.sflag [#allocation4], %s189
        %s191 = sand.u32 %s51, 1
        %s192 = smul.addr %s191, 8
        %s193 = scalar_lea.vmem [#allocation3], %s192
        // Predicated region
        $region29: #{tpu_custom_call.1} parent=27 // pred_check
          %p194 = pneg %p64
        $region30: #{tpu_custom_call.1} parent=27 // pred_check_branch
          %196 = sbr.rel (%p194) target = $region32
        $region31: #{tpu_custom_call.1} parent=27 // pred_region
          %197 = dma.done %s190, 128
        $region32: #{tpu_custom_call.1} parent=27 // pred_fallthru
          _
        %s198 = sand.u32 %s81, 1
        %s199 = scalar_lea.sflag [#allocation7], %s198
        %s200 = sand.u32 %s81, 1
        %s201 = smul.addr %s200, 8
        %s202 = scalar_lea.vmem [#allocation6], %s201
        // Predicated region
        $region33: #{tpu_custom_call.1} parent=27 // pred_check
          %p203 = pneg %p94
        $region34: #{tpu_custom_call.1} parent=27 // pred_check_branch
          %205 = sbr.rel (%p203) target = $region36
        $region35: #{tpu_custom_call.1} parent=27 // pred_region
          %206 = dma.done %s199, 128
        $region36: #{tpu_custom_call.1} parent=27 // pred_fallthru
          _
        %s207 = sand.u32 %s51, 1
        %s208 = scalar_lea.sflag [#allocation4], %s207
        %s209 = sand.u32 %s51, 1
        %s210 = smul.addr %s209, 8
        %s211 = scalar_lea.vmem [#allocation3], %s210
        %p212 = pneg %p64
        %p213 = pneg %p61
        %s214 = sand.u32 %s81, 1
        %s215 = scalar_lea.sflag [#allocation7], %s214
        %s216 = sand.u32 %s81, 1
        %s217 = smul.addr %s216, 8
        %s218 = scalar_lea.vmem [#allocation6], %s217
        %p219 = pneg %p94
        %p220 = pneg %p91
        %p221 = pneg %p120
        %p222 = pneg %p117
        %s223 = sadd.s32 %s25, %s27
        %s224 = sadd.s32 %s25, %s27
        %p225 = scmp.eq.s32.totalorder %s26, 0
        %p226 = scmp.eq.s32.totalorder %s27, 0
        %p227 = pnand %p225, %p226
        %p228 = pneg %p227
        // Predicated region
        $region37: #{tpu_custom_call.1} parent=27 // pred_check
          _
        $region38: #{tpu_custom_call.1} parent=27 // pred_check_branch
          %230 = sbr.rel (%p227) target = $region40
        $region39: #{tpu_custom_call.1} parent=27 // pred_region
          %231 = vst [vmem:[#allocation2] sm:$0xff] 0.0
        $region40: #{tpu_custom_call.1} parent=27 // pred_fallthru
          _
        %v232 = vld [vmem:[%s193] sm:$0xff]
        %v233 = vld [vmem:[%s202] sm:$0xff]
        %v234 = vmax.f32 %v233, -30.0
        %v235 = vmin.f32 %v234, 20.0
        %v236 = vmul.f32 %v232, %v232
        %v237 = vmul.f32 %v235, 1.442695
        %v238 = vpow.pop %v237
        %v239 = vadd.f32 %v236, %v238
        %v240 = vsub.f32 %v239, 1.0
        %v241 = vsub.f32 %v240, %v235
        %v242 = vld [vmem:[#allocation2] sm:$0xff]
        %v243 = vadd.f32 %v241, 0.0
        %v244 = vadd.f32 %v242, %v243
        %245 = vst [vmem:[#allocation2] sm:$0xff] %v244
        %p246 = scmp.eq.s32.totalorder %s26, 1
        %p247 = pnand %p246, %p226
        %p248 = pneg %p247
        // Predicated region
        $region41: #{tpu_custom_call.1} parent=27 // pred_check
          _
        $region42: #{tpu_custom_call.1} parent=27 // pred_check_branch
          %250 = sbr.rel (%p247) target = $region44
        $region43: #{tpu_custom_call.1} parent=27 // pred_region
          %v251 = vld [vmem:[#allocation2] sm:$0xff]
          %252 = vadd.xlane.f32.xlu0 %v251
          %v253 = vpop.xlane.xlu0 %252
          %v254 = vrot.slane %v253, 4
          %v255 = vadd.f32 %v253, %v254
          %v256 = vrot.slane %v255, 2
          %v257 = vadd.f32 %v255, %v256
          %v258 = vrot.slane %v257, 1
          %v259 = vadd.f32 %v257, %v258
          %s260 = vtos %v259
          %v261 = vstv %s260
          %vm262 = vcmask 0
          %263 = vst.msk [vmem:[#allocation8] sm:$0x1] %vm262, %v261
        $region44: #{tpu_custom_call.1} parent=27 // pred_fallthru
          _
        // Predicated region
        $region45: #{tpu_custom_call.1} parent=27 // pred_check
          %p264 = pneg %p117
        $region46: #{tpu_custom_call.1} parent=27 // pred_check_branch
          %266 = sbr.rel (%p264) target = $region48
        $region47: #{tpu_custom_call.1} parent=27 // pred_region
          %s268 = ssub.s32 16, 16
          %269 = vsyncadd [#allocation5], %s268
          %s270 = smul.addr %s25, 16
          %s271 = scalar_lea.hbm %s2, %s270
          %s273 = sshll.u32 [#allocation8], 4
          %s274 = int_to_ptr.vmem [resolvable:$true] %s273
          %276 = dma.vmem_to_hbm [thread:$0]  %s274, 16, %s271, [#allocation5]
        $region48: #{tpu_custom_call.1} parent=27 // pred_fallthru
          _
        // Predicated region
        $region49: #{tpu_custom_call.1} parent=27 // pred_check
          %p277 = pneg %p117
        $region50: #{tpu_custom_call.1} parent=27 // pred_check_branch
          %279 = sbr.rel (%p277) target = $region52
        $region51: #{tpu_custom_call.1} parent=27 // pred_region
          %280 = dma.done [#allocation5], 16
        $region52: #{tpu_custom_call.1} parent=27 // pred_fallthru
          _
      $region28: #{tpu_custom_call.1} parent=5 // pred_fallthru
        _
      %p281 = scmp.le.s32.totalorder 2, %s15
      // Predicated region
      $region53: #{tpu_custom_call.1} parent=5 // pred_check
        %p282 = pneg %p281
      $region54: #{tpu_custom_call.1} parent=5 // pred_check_branch
        %284 = sbr.rel (%p282) target = $region56
      $region55: #{tpu_custom_call.1} parent=5 // pred_region
        %s285 = ssub.s32 %s15, 2
      $region56: #{tpu_custom_call.1} parent=5 // pred_fallthru
        _
    $region6: #{tpu_custom_call.1} parent=1 // loop_footer
      %s19 = sadd.s32 1, %s15
    $region7: #{tpu_custom_call.1} parent=1 // loop_footer_branch
      %14 = sbr.rel target = $region3
    $region8: #{tpu_custom_call.1} parent=1 // loop_exit
      _
    %286 = vsyncpa [#allocation4], 1
    %s287 = scalar_lea.sflag [#allocation4], 1
    %288 = vsyncpa %s287, 1
    %289 = vsyncpa [#allocation7], 1
    %s290 = scalar_lea.sflag [#allocation7], 1
    %291 = vsyncpa %s290, 1
    %292 = vsyncpa [#allocation5], 1
    %s293 = scalar_lea.sflag [#allocation5], 1
    %294 = vsyncpa %s293, 1

</llo_original>
